<compile_context>
chip_gen: v7x
topology: tpu7x:2x2x1
jax: 0.10.0
libtpu: 0.0.40
codegen_flags: <defaults>
</compile_context>

<pallas_src>
import numpy as np
import jax
import jax.numpy as jnp
from jax.experimental import pallas as pl
from jax.experimental.pallas import tpu as pltpu


def _make_unpool_kernel(rows_per_step, row_shape, out_dtype):
    """Kernel factory; rows_per_step / row_shape / dtype are static."""

    def kernel(inv_ref, feat_hbm, out_ref, sems):
        # inv_ref  : SMEM scalar-prefetch ref, (N_after,) int32
        # feat_hbm : HBM (pl.ANY) ref, (N_before, *row_shape)
        # out_ref  : VMEM block, (rows_per_step, *row_shape)
        # sems     : DMA semaphores, (rows_per_step,)
        base = pl.program_id(0) * rows_per_step

        # Issue gather DMAs for rows that have a source; zero-fill the holes.
        for r in range(rows_per_step):
            src = inv_ref[base + r]

            @pl.when(src >= 0)
            def _issue(src=src, r=r):
                pltpu.make_async_copy(
                    feat_hbm.at[src], out_ref.at[r], sems.at[r]).start()

            @pl.when(src < 0)
            def _zero(r=r):
                out_ref[r] = jnp.zeros(row_shape, dtype=out_dtype)

        # Wait for every issued DMA before the pipeline writes the block back.
        for r in range(rows_per_step):
            src = inv_ref[base + r]

            @pl.when(src >= 0)
            def _wait(src=src, r=r):
                pltpu.make_async_copy(
                    feat_hbm.at[src], out_ref.at[r], sems.at[r]).wait()

    return kernel


def pallas_unpool(feature, inv):
    """feature: [N_before, C, H, W]; inv: [N_after] int32 (inv[j]=src row or -1)."""
    n_after = inv.shape[0]
    nb, c, h, w = feature.shape
    f = c * h * w
    dtype = feature.dtype

    # Lane-dense per-row layout when possible (feedback #1).
    if f % 128 == 0:
        row_shape = (f // 128, 128)
    else:
        row_shape = (c, h, w)
        # TODO(synk): pad the flattened payload to a multiple of 128 lanes for
        # lane-dense stores when C*H*W is not divisible by 128.

    feat2 = feature.reshape((nb,) + row_shape)

    # Rows per grid step: largest divisor of n_after <= 8, bounded so the
    # double-buffered output block stays well inside the scoped-VMEM default
    # on every chip generation (v7x included).
    row_bytes = f * np.dtype(dtype).itemsize
    vmem_budget_rows = max(1, (8 * 1024 * 1024) // (2 * max(1, row_bytes)))
    r_max = int(min(8, n_after, vmem_budget_rows))
    rows_per_step = 1
    for cand in range(r_max, 0, -1):
        if n_after % cand == 0:
            rows_per_step = cand
            break

    kernel = _make_unpool_kernel(rows_per_step, row_shape, dtype)
    n_extra = len(row_shape)  # trailing block dims after the node axis

    grid_spec = pltpu.PrefetchScalarGridSpec(
        num_scalar_prefetch=1,
        grid=(n_after // rows_per_step,),
        in_specs=[
            pl.BlockSpec(memory_space=pl.ANY),  # feature stays in HBM
        ],
        out_specs=pl.BlockSpec(
            (rows_per_step,) + row_shape,
            lambda j, inv_ref: (j,) + (0,) * n_extra,
        ),
        scratch_shapes=[pltpu.SemaphoreType.DMA((rows_per_step,))],
    )

    out = pl.pallas_call(
        kernel,
        out_shape=jax.ShapeDtypeStruct((n_after,) + row_shape, dtype),
        grid_spec=grid_spec,
        compiler_params=pltpu.CompilerParams(
            dimension_semantics=("parallel",)),
    )(inv, feat2)

    return out.reshape(n_after, c, h, w)


class Unpool:
    """Mirror of the PyTorch module; graphs are only used for their shapes."""

    def __init__(self, after_graph, before_graph, idx):
        self.graph_after_unpool = after_graph
        self.graph_before_unpool = before_graph

        idx_np = np.asarray(idx, dtype=np.int32)
        n_after = int(after_graph.shape[1])
        if idx_np.size:
            assert idx_np.min() >= 0 and idx_np.max() < n_after, "idx out of range"

        # Host-side inverse map (last write wins on duplicate idx entries,
        # matching PyTorch's scatter-assign behavior for unique/typical idx).
        inv = np.full((n_after,), -1, dtype=np.int32)
        inv[idx_np] = np.arange(idx_np.shape[0], dtype=np.int32)

        self.before_in_after_idx = jnp.asarray(idx_np)
        self._inv = jnp.asarray(inv)

    def __call__(self, feature):
        return pallas_unpool(feature, self._inv)


if __name__ == "__main__":
    key = jax.random.PRNGKey(0)

    # Synthetic graph structures (only shape[1] of after_graph matters).
    n_before, n_after = 6, 12
    c, h, w = 4, 16, 16
    after_graph = jnp.zeros((n_after, n_after), dtype=jnp.float32)
    before_graph = jnp.zeros((n_before, n_before), dtype=jnp.float32)
    idx = jnp.array([0, 2, 5, 7, 8, 11], dtype=jnp.int32)  # before -> after

    feature = jax.random.normal(key, (n_before, c, h, w), dtype=jnp.float32)

    unpool = Unpool(after_graph, before_graph, idx)
    out = jax.block_until_ready(unpool(feature))

    # Reference (pure JAX) check of the PyTorch semantics.
    ref = jnp.zeros((n_after, c, h, w), dtype=feature.dtype).at[idx].set(feature)
    np.testing.assert_allclose(np.asarray(out), np.asarray(ref), rtol=0, atol=0)

    print("KERNEL_OK")
</pallas_src>

<mosaic_0001>
module attributes {stable_mosaic.version = 11 : i64} {
  func.func @kernel(%arg0: i32, %arg1: memref<12xi32, #tpu.memory_space<smem>>, %arg2: memref<6x8x128xf32, #tpu.memory_space<any>>, %arg3: memref<6x8x128xf32, #tpu.memory_space<vmem>>, %arg4: memref<6x!tpu.dma_semaphore, #tpu.memory_space<semaphore_mem>>) attributes {dimension_semantics = [#tpu.dimension_semantics<parallel>], iteration_bounds = array<i64: 2>, scalar_prefetch = 1 : i64, scratch_operands = 1 : i64, tpu.core_type = #tpu.core_type<tc>, window_params = [{}, {transform_indices = @transform_1, window_bounds = array<i64: 6, 8, 128>}]} {
    %c6_i32 = arith.constant 6 : i32
    %0 = arith.muli %arg0, %c6_i32 : i32
    %c0_i32 = arith.constant 0 : i32
    %1 = arith.addi %0, %c0_i32 : i32
    %2 = arith.index_cast %1 : i32 to index
    %3 = memref.load %arg1[%2] : memref<12xi32, #tpu.memory_space<smem>>
    %c0_i32_0 = arith.constant 0 : i32
    %4 = arith.cmpi sge, %3, %c0_i32_0 : i32
    %5 = arith.extui %4 : i1 to i32
    %c0_i32_1 = arith.constant 0 : i32
    %6 = arith.cmpi ne, %5, %c0_i32_1 : i32
    scf.if %6 {
      %c0_i32_42 = arith.constant 0 : i32
      %c0_i32_43 = arith.constant 0 : i32
      %c0_i32_44 = arith.constant 0 : i32
      %c0_i32_45 = arith.constant 0 : i32
      %91 = tpu.memref_slice %arg2[%3, %c0_i32_44, %c0_i32_45] : memref<6x8x128xf32, #tpu.memory_space<any>> -> memref<1x8x128xf32, #tpu.memory_space<any>>
      %92 = tpu.memref_squeeze %91 : memref<1x8x128xf32, #tpu.memory_space<any>> -> memref<8x128xf32, #tpu.memory_space<any>>
      %c0_i32_46 = arith.constant 0 : i32
      %c0_i32_47 = arith.constant 0 : i32
      %93 = tpu.memref_slice %arg3[%c0_i32_42, %c0_i32_46, %c0_i32_47] : memref<6x8x128xf32, #tpu.memory_space<vmem>> -> memref<1x8x128xf32, #tpu.memory_space<vmem>>
      %94 = tpu.memref_squeeze %93 : memref<1x8x128xf32, #tpu.memory_space<vmem>> -> memref<8x128xf32, #tpu.memory_space<vmem>>
      %95 = tpu.memref_slice %arg4[%c0_i32_43] : memref<6x!tpu.dma_semaphore, #tpu.memory_space<semaphore_mem>> -> memref<1x!tpu.dma_semaphore, #tpu.memory_space<semaphore_mem>>
      %96 = tpu.memref_squeeze %95 : memref<1x!tpu.dma_semaphore, #tpu.memory_space<semaphore_mem>> -> memref<!tpu.dma_semaphore, #tpu.memory_space<semaphore_mem>>
      tpu.enqueue_dma source(%92 : memref<8x128xf32, #tpu.memory_space<any>>) target(%94 : memref<8x128xf32, #tpu.memory_space<vmem>>) target_semaphore(%96 : memref<!tpu.dma_semaphore, #tpu.memory_space<semaphore_mem>>)
    } else {
    }
    %c0_i32_2 = arith.constant 0 : i32
    %7 = arith.cmpi slt, %3, %c0_i32_2 : i32
    %8 = arith.extui %7 : i1 to i32
    %c0_i32_3 = arith.constant 0 : i32
    %9 = arith.cmpi ne, %8, %c0_i32_3 : i32
    scf.if %9 {
      %cst = arith.constant 0.000000e+00 : f32
      %91 = vector.broadcast %cst : f32 to vector<8x128xf32>
      %c0 = arith.constant 0 : index
      %c0_42 = arith.constant 0 : index
      %c0_43 = arith.constant 0 : index
      %92 = vector.load %arg3[%c0, %c0_42, %c0_43] : memref<6x8x128xf32, #tpu.memory_space<vmem>>, vector<1x8x128xf32>
      %93 = vector.shape_cast %92 : vector<1x8x128xf32> to vector<8x128xf32>
      %94 = vector.shape_cast %91 : vector<8x128xf32> to vector<1x8x128xf32>
      tpu.vector_store %arg3[%c0, %c0_42, %c0_43], %94 {strides = array<i32>} : memref<6x8x128xf32, #tpu.memory_space<vmem>>, vector<1x8x128xf32>,
    } else {
    }
    %c1_i32 = arith.constant 1 : i32
    %10 = arith.addi %0, %c1_i32 : i32
    %11 = arith.index_cast %10 : i32 to index
    %12 = memref.load %arg1[%11] : memref<12xi32, #tpu.memory_space<smem>>
    %c0_i32_4 = arith.constant 0 : i32
    %13 = arith.cmpi sge, %12, %c0_i32_4 : i32
    %14 = arith.extui %13 : i1 to i32
    %c0_i32_5 = arith.constant 0 : i32
    %15 = arith.cmpi ne, %14, %c0_i32_5 : i32
    scf.if %15 {
      %c1_i32_42 = arith.constant 1 : i32
      %c1_i32_43 = arith.constant 1 : i32
      %c0_i32_44 = arith.constant 0 : i32
      %c0_i32_45 = arith.constant 0 : i32
      %91 = tpu.memref_slice %arg2[%12, %c0_i32_44, %c0_i32_45] : memref<6x8x128xf32, #tpu.memory_space<any>> -> memref<1x8x128xf32, #tpu.memory_space<any>>
      %92 = tpu.memref_squeeze %91 : memref<1x8x128xf32, #tpu.memory_space<any>> -> memref<8x128xf32, #tpu.memory_space<any>>
      %c0_i32_46 = arith.constant 0 : i32
      %c0_i32_47 = arith.constant 0 : i32
      %93 = tpu.memref_slice %arg3[%c1_i32_42, %c0_i32_46, %c0_i32_47] : memref<6x8x128xf32, #tpu.memory_space<vmem>> -> memref<1x8x128xf32, #tpu.memory_space<vmem>>
      %94 = tpu.memref_squeeze %93 : memref<1x8x128xf32, #tpu.memory_space<vmem>> -> memref<8x128xf32, #tpu.memory_space<vmem>>
      %95 = tpu.memref_slice %arg4[%c1_i32_43] : memref<6x!tpu.dma_semaphore, #tpu.memory_space<semaphore_mem>> -> memref<1x!tpu.dma_semaphore, #tpu.memory_space<semaphore_mem>>
      %96 = tpu.memref_squeeze %95 : memref<1x!tpu.dma_semaphore, #tpu.memory_space<semaphore_mem>> -> memref<!tpu.dma_semaphore, #tpu.memory_space<semaphore_mem>>
      tpu.enqueue_dma source(%92 : memref<8x128xf32, #tpu.memory_space<any>>) target(%94 : memref<8x128xf32, #tpu.memory_space<vmem>>) target_semaphore(%96 : memref<!tpu.dma_semaphore, #tpu.memory_space<semaphore_mem>>)
    } else {
    }
    %c0_i32_6 = arith.constant 0 : i32
    %16 = arith.cmpi slt, %12, %c0_i32_6 : i32
    %17 = arith.extui %16 : i1 to i32
    %c0_i32_7 = arith.constant 0 : i32
    %18 = arith.cmpi ne, %17, %c0_i32_7 : i32
    scf.if %18 {
      %cst = arith.constant 0.000000e+00 : f32
      %91 = vector.broadcast %cst : f32 to vector<8x128xf32>
      %c1 = arith.constant 1 : index
      %c0 = arith.constant 0 : index
      %c0_42 = arith.constant 0 : index
      %92 = vector.load %arg3[%c1, %c0, %c0_42] : memref<6x8x128xf32, #tpu.memory_space<vmem>>, vector<1x8x128xf32>
      %93 = vector.shape_cast %92 : vector<1x8x128xf32> to vector<8x128xf32>
      %94 = vector.shape_cast %91 : vector<8x128xf32> to vector<1x8x128xf32>
      tpu.vector_store %arg3[%c1, %c0, %c0_42], %94 {strides = array<i32>} : memref<6x8x128xf32, #tpu.memory_space<vmem>>, vector<1x8x128xf32>,
    } else {
    }
    %c2_i32 = arith.constant 2 : i32
    %19 = arith.addi %0, %c2_i32 : i32
    %20 = arith.index_cast %19 : i32 to index
    %21 = memref.load %arg1[%20] : memref<12xi32, #tpu.memory_space<smem>>
    %c0_i32_8 = arith.constant 0 : i32
    %22 = arith.cmpi sge, %21, %c0_i32_8 : i32
    %23 = arith.extui %22 : i1 to i32
    %c0_i32_9 = arith.constant 0 : i32
    %24 = arith.cmpi ne, %23, %c0_i32_9 : i32
    scf.if %24 {
      %c2_i32_42 = arith.constant 2 : i32
      %c2_i32_43 = arith.constant 2 : i32
      %c0_i32_44 = arith.constant 0 : i32
      %c0_i32_45 = arith.constant 0 : i32
      %91 = tpu.memref_slice %arg2[%21, %c0_i32_44, %c0_i32_45] : memref<6x8x128xf32, #tpu.memory_space<any>> -> memref<1x8x128xf32, #tpu.memory_space<any>>
      %92 = tpu.memref_squeeze %91 : memref<1x8x128xf32, #tpu.memory_space<any>> -> memref<8x128xf32, #tpu.memory_space<any>>
      %c0_i32_46 = arith.constant 0 : i32
      %c0_i32_47 = arith.constant 0 : i32
      %93 = tpu.memref_slice %arg3[%c2_i32_42, %c0_i32_46, %c0_i32_47] : memref<6x8x128xf32, #tpu.memory_space<vmem>> -> memref<1x8x128xf32, #tpu.memory_space<vmem>>
      %94 = tpu.memref_squeeze %93 : memref<1x8x128xf32, #tpu.memory_space<vmem>> -> memref<8x128xf32, #tpu.memory_space<vmem>>
      %95 = tpu.memref_slice %arg4[%c2_i32_43] : memref<6x!tpu.dma_semaphore, #tpu.memory_space<semaphore_mem>> -> memref<1x!tpu.dma_semaphore, #tpu.memory_space<semaphore_mem>>
      %96 = tpu.memref_squeeze %95 : memref<1x!tpu.dma_semaphore, #tpu.memory_space<semaphore_mem>> -> memref<!tpu.dma_semaphore, #tpu.memory_space<semaphore_mem>>
      tpu.enqueue_dma source(%92 : memref<8x128xf32, #tpu.memory_space<any>>) target(%94 : memref<8x128xf32, #tpu.memory_space<vmem>>) target_semaphore(%96 : memref<!tpu.dma_semaphore, #tpu.memory_space<semaphore_mem>>)
    } else {
    }
    %c0_i32_10 = arith.constant 0 : i32
    %25 = arith.cmpi slt, %21, %c0_i32_10 : i32
    %26 = arith.extui %25 : i1 to i32
    %c0_i32_11 = arith.constant 0 : i32
    %27 = arith.cmpi ne, %26, %c0_i32_11 : i32
    scf.if %27 {
      %cst = arith.constant 0.000000e+00 : f32
      %91 = vector.broadcast %cst : f32 to vector<8x128xf32>
      %c2 = arith.constant 2 : index
      %c0 = arith.constant 0 : index
      %c0_42 = arith.constant 0 : index
      %92 = vector.load %arg3[%c2, %c0, %c0_42] : memref<6x8x128xf32, #tpu.memory_space<vmem>>, vector<1x8x128xf32>
      %93 = vector.shape_cast %92 : vector<1x8x128xf32> to vector<8x128xf32>
      %94 = vector.shape_cast %91 : vector<8x128xf32> to vector<1x8x128xf32>
      tpu.vector_store %arg3[%c2, %c0, %c0_42], %94 {strides = array<i32>} : memref<6x8x128xf32, #tpu.memory_space<vmem>>, vector<1x8x128xf32>,
    } else {
    }
    %c3_i32 = arith.constant 3 : i32
    %28 = arith.addi %0, %c3_i32 : i32
    %29 = arith.index_cast %28 : i32 to index
    %30 = memref.load %arg1[%29] : memref<12xi32, #tpu.memory_space<smem>>
    %c0_i32_12 = arith.constant 0 : i32
    %31 = arith.cmpi sge, %30, %c0_i32_12 : i32
    %32 = arith.extui %31 : i1 to i32
    %c0_i32_13 = arith.constant 0 : i32
    %33 = arith.cmpi ne, %32, %c0_i32_13 : i32
    scf.if %33 {
      %c3_i32_42 = arith.constant 3 : i32
      %c3_i32_43 = arith.constant 3 : i32
      %c0_i32_44 = arith.constant 0 : i32
      %c0_i32_45 = arith.constant 0 : i32
      %91 = tpu.memref_slice %arg2[%30, %c0_i32_44, %c0_i32_45] : memref<6x8x128xf32, #tpu.memory_space<any>> -> memref<1x8x128xf32, #tpu.memory_space<any>>
      %92 = tpu.memref_squeeze %91 : memref<1x8x128xf32, #tpu.memory_space<any>> -> memref<8x128xf32, #tpu.memory_space<any>>
      %c0_i32_46 = arith.constant 0 : i32
      %c0_i32_47 = arith.constant 0 : i32
      %93 = tpu.memref_slice %arg3[%c3_i32_42, %c0_i32_46, %c0_i32_47] : memref<6x8x128xf32, #tpu.memory_space<vmem>> -> memref<1x8x128xf32, #tpu.memory_space<vmem>>
      %94 = tpu.memref_squeeze %93 : memref<1x8x128xf32, #tpu.memory_space<vmem>> -> memref<8x128xf32, #tpu.memory_space<vmem>>
      %95 = tpu.memref_slice %arg4[%c3_i32_43] : memref<6x!tpu.dma_semaphore, #tpu.memory_space<semaphore_mem>> -> memref<1x!tpu.dma_semaphore, #tpu.memory_space<semaphore_mem>>
      %96 = tpu.memref_squeeze %95 : memref<1x!tpu.dma_semaphore, #tpu.memory_space<semaphore_mem>> -> memref<!tpu.dma_semaphore, #tpu.memory_space<semaphore_mem>>
      tpu.enqueue_dma source(%92 : memref<8x128xf32, #tpu.memory_space<any>>) target(%94 : memref<8x128xf32, #tpu.memory_space<vmem>>) target_semaphore(%96 : memref<!tpu.dma_semaphore, #tpu.memory_space<semaphore_mem>>)
    } else {
    }
    %c0_i32_14 = arith.constant 0 : i32
    %34 = arith.cmpi slt, %30, %c0_i32_14 : i32
    %35 = arith.extui %34 : i1 to i32
    %c0_i32_15 = arith.constant 0 : i32
    %36 = arith.cmpi ne, %35, %c0_i32_15 : i32
    scf.if %36 {
      %cst = arith.constant 0.000000e+00 : f32
      %91 = vector.broadcast %cst : f32 to vector<8x128xf32>
      %c3 = arith.constant 3 : index
      %c0 = arith.constant 0 : index
      %c0_42 = arith.constant 0 : index
      %92 = vector.load %arg3[%c3, %c0, %c0_42] : memref<6x8x128xf32, #tpu.memory_space<vmem>>, vector<1x8x128xf32>
      %93 = vector.shape_cast %92 : vector<1x8x128xf32> to vector<8x128xf32>
      %94 = vector.shape_cast %91 : vector<8x128xf32> to vector<1x8x128xf32>
      tpu.vector_store %arg3[%c3, %c0, %c0_42], %94 {strides = array<i32>} : memref<6x8x128xf32, #tpu.memory_space<vmem>>, vector<1x8x128xf32>,
    } else {
    }
    %c4_i32 = arith.constant 4 : i32
    %37 = arith.addi %0, %c4_i32 : i32
    %38 = arith.index_cast %37 : i32 to index
    %39 = memref.load %arg1[%38] : memref<12xi32, #tpu.memory_space<smem>>
    %c0_i32_16 = arith.constant 0 : i32
    %40 = arith.cmpi sge, %39, %c0_i32_16 : i32
    %41 = arith.extui %40 : i1 to i32
    %c0_i32_17 = arith.constant 0 : i32
    %42 = arith.cmpi ne, %41, %c0_i32_17 : i32
    scf.if %42 {
      %c4_i32_42 = arith.constant 4 : i32
      %c4_i32_43 = arith.constant 4 : i32
      %c0_i32_44 = arith.constant 0 : i32
      %c0_i32_45 = arith.constant 0 : i32
      %91 = tpu.memref_slice %arg2[%39, %c0_i32_44, %c0_i32_45] : memref<6x8x128xf32, #tpu.memory_space<any>> -> memref<1x8x128xf32, #tpu.memory_space<any>>
      %92 = tpu.memref_squeeze %91 : memref<1x8x128xf32, #tpu.memory_space<any>> -> memref<8x128xf32, #tpu.memory_space<any>>
      %c0_i32_46 = arith.constant 0 : i32
      %c0_i32_47 = arith.constant 0 : i32
      %93 = tpu.memref_slice %arg3[%c4_i32_42, %c0_i32_46, %c0_i32_47] : memref<6x8x128xf32, #tpu.memory_space<vmem>> -> memref<1x8x128xf32, #tpu.memory_space<vmem>>
      %94 = tpu.memref_squeeze %93 : memref<1x8x128xf32, #tpu.memory_space<vmem>> -> memref<8x128xf32, #tpu.memory_space<vmem>>
      %95 = tpu.memref_slice %arg4[%c4_i32_43] : memref<6x!tpu.dma_semaphore, #tpu.memory_space<semaphore_mem>> -> memref<1x!tpu.dma_semaphore, #tpu.memory_space<semaphore_mem>>
      %96 = tpu.memref_squeeze %95 : memref<1x!tpu.dma_semaphore, #tpu.memory_space<semaphore_mem>> -> memref<!tpu.dma_semaphore, #tpu.memory_space<semaphore_mem>>
      tpu.enqueue_dma source(%92 : memref<8x128xf32, #tpu.memory_space<any>>) target(%94 : memref<8x128xf32, #tpu.memory_space<vmem>>) target_semaphore(%96 : memref<!tpu.dma_semaphore, #tpu.memory_space<semaphore_mem>>)
    } else {
    }
    %c0_i32_18 = arith.constant 0 : i32
    %43 = arith.cmpi slt, %39, %c0_i32_18 : i32
    %44 = arith.extui %43 : i1 to i32
    %c0_i32_19 = arith.constant 0 : i32
    %45 = arith.cmpi ne, %44, %c0_i32_19 : i32
    scf.if %45 {
      %cst = arith.constant 0.000000e+00 : f32
      %91 = vector.broadcast %cst : f32 to vector<8x128xf32>
      %c4 = arith.constant 4 : index
      %c0 = arith.constant 0 : index
      %c0_42 = arith.constant 0 : index
      %92 = vector.load %arg3[%c4, %c0, %c0_42] : memref<6x8x128xf32, #tpu.memory_space<vmem>>, vector<1x8x128xf32>
      %93 = vector.shape_cast %92 : vector<1x8x128xf32> to vector<8x128xf32>
      %94 = vector.shape_cast %91 : vector<8x128xf32> to vector<1x8x128xf32>
      tpu.vector_store %arg3[%c4, %c0, %c0_42], %94 {strides = array<i32>} : memref<6x8x128xf32, #tpu.memory_space<vmem>>, vector<1x8x128xf32>,
    } else {
    }
    %c5_i32 = arith.constant 5 : i32
    %46 = arith.addi %0, %c5_i32 : i32
    %47 = arith.index_cast %46 : i32 to index
    %48 = memref.load %arg1[%47] : memref<12xi32, #tpu.memory_space<smem>>
    %c0_i32_20 = arith.constant 0 : i32
    %49 = arith.cmpi sge, %48, %c0_i32_20 : i32
    %50 = arith.extui %49 : i1 to i32
    %c0_i32_21 = arith.constant 0 : i32
    %51 = arith.cmpi ne, %50, %c0_i32_21 : i32
    scf.if %51 {
      %c5_i32_42 = arith.constant 5 : i32
      %c5_i32_43 = arith.constant 5 : i32
      %c0_i32_44 = arith.constant 0 : i32
      %c0_i32_45 = arith.constant 0 : i32
      %91 = tpu.memref_slice %arg2[%48, %c0_i32_44, %c0_i32_45] : memref<6x8x128xf32, #tpu.memory_space<any>> -> memref<1x8x128xf32, #tpu.memory_space<any>>
      %92 = tpu.memref_squeeze %91 : memref<1x8x128xf32, #tpu.memory_space<any>> -> memref<8x128xf32, #tpu.memory_space<any>>
      %c0_i32_46 = arith.constant 0 : i32
      %c0_i32_47 = arith.constant 0 : i32
      %93 = tpu.memref_slice %arg3[%c5_i32_42, %c0_i32_46, %c0_i32_47] : memref<6x8x128xf32, #tpu.memory_space<vmem>> -> memref<1x8x128xf32, #tpu.memory_space<vmem>>
      %94 = tpu.memref_squeeze %93 : memref<1x8x128xf32, #tpu.memory_space<vmem>> -> memref<8x128xf32, #tpu.memory_space<vmem>>
      %95 = tpu.memref_slice %arg4[%c5_i32_43] : memref<6x!tpu.dma_semaphore, #tpu.memory_space<semaphore_mem>> -> memref<1x!tpu.dma_semaphore, #tpu.memory_space<semaphore_mem>>
      %96 = tpu.memref_squeeze %95 : memref<1x!tpu.dma_semaphore, #tpu.memory_space<semaphore_mem>> -> memref<!tpu.dma_semaphore, #tpu.memory_space<semaphore_mem>>
      tpu.enqueue_dma source(%92 : memref<8x128xf32, #tpu.memory_space<any>>) target(%94 : memref<8x128xf32, #tpu.memory_space<vmem>>) target_semaphore(%96 : memref<!tpu.dma_semaphore, #tpu.memory_space<semaphore_mem>>)
    } else {
    }
    %c0_i32_22 = arith.constant 0 : i32
    %52 = arith.cmpi slt, %48, %c0_i32_22 : i32
    %53 = arith.extui %52 : i1 to i32
    %c0_i32_23 = arith.constant 0 : i32
    %54 = arith.cmpi ne, %53, %c0_i32_23 : i32
    scf.if %54 {
      %cst = arith.constant 0.000000e+00 : f32
      %91 = vector.broadcast %cst : f32 to vector<8x128xf32>
      %c5 = arith.constant 5 : index
      %c0 = arith.constant 0 : index
      %c0_42 = arith.constant 0 : index
      %92 = vector.load %arg3[%c5, %c0, %c0_42] : memref<6x8x128xf32, #tpu.memory_space<vmem>>, vector<1x8x128xf32>
      %93 = vector.shape_cast %92 : vector<1x8x128xf32> to vector<8x128xf32>
      %94 = vector.shape_cast %91 : vector<8x128xf32> to vector<1x8x128xf32>
      tpu.vector_store %arg3[%c5, %c0, %c0_42], %94 {strides = array<i32>} : memref<6x8x128xf32, #tpu.memory_space<vmem>>, vector<1x8x128xf32>,
    } else {
    }
    %c0_i32_24 = arith.constant 0 : i32
    %55 = arith.addi %0, %c0_i32_24 : i32
    %56 = arith.index_cast %55 : i32 to index
    %57 = memref.load %arg1[%56] : memref<12xi32, #tpu.memory_space<smem>>
    %c0_i32_25 = arith.constant 0 : i32
    %58 = arith.cmpi sge, %57, %c0_i32_25 : i32
    %59 = arith.extui %58 : i1 to i32
    %c0_i32_26 = arith.constant 0 : i32
    %60 = arith.cmpi ne, %59, %c0_i32_26 : i32
    scf.if %60 {
      %c0_i32_42 = arith.constant 0 : i32
      %c0_i32_43 = arith.constant 0 : i32
      %c0_i32_44 = arith.constant 0 : i32
      %c0_i32_45 = arith.constant 0 : i32
      %91 = tpu.memref_slice %arg2[%57, %c0_i32_44, %c0_i32_45] : memref<6x8x128xf32, #tpu.memory_space<any>> -> memref<1x8x128xf32, #tpu.memory_space<any>>
      %92 = tpu.memref_squeeze %91 : memref<1x8x128xf32, #tpu.memory_space<any>> -> memref<8x128xf32, #tpu.memory_space<any>>
      %c0_i32_46 = arith.constant 0 : i32
      %c0_i32_47 = arith.constant 0 : i32
      %93 = tpu.memref_slice %arg3[%c0_i32_42, %c0_i32_46, %c0_i32_47] : memref<6x8x128xf32, #tpu.memory_space<vmem>> -> memref<1x8x128xf32, #tpu.memory_space<vmem>>
      %94 = tpu.memref_squeeze %93 : memref<1x8x128xf32, #tpu.memory_space<vmem>> -> memref<8x128xf32, #tpu.memory_space<vmem>>
      %95 = tpu.memref_slice %arg4[%c0_i32_43] : memref<6x!tpu.dma_semaphore, #tpu.memory_space<semaphore_mem>> -> memref<1x!tpu.dma_semaphore, #tpu.memory_space<semaphore_mem>>
      %96 = tpu.memref_squeeze %95 : memref<1x!tpu.dma_semaphore, #tpu.memory_space<semaphore_mem>> -> memref<!tpu.dma_semaphore, #tpu.memory_space<semaphore_mem>>
      tpu.wait_dma2 semaphore(%96 : memref<!tpu.dma_semaphore, #tpu.memory_space<semaphore_mem>>) src(%92 : memref<8x128xf32, #tpu.memory_space<any>>) dst(%94 : memref<8x128xf32, #tpu.memory_space<vmem>>)
    } else {
    }
    %c1_i32_27 = arith.constant 1 : i32
    %61 = arith.addi %0, %c1_i32_27 : i32
    %62 = arith.index_cast %61 : i32 to index
    %63 = memref.load %arg1[%62] : memref<12xi32, #tpu.memory_space<smem>>
    %c0_i32_28 = arith.constant 0 : i32
    %64 = arith.cmpi sge, %63, %c0_i32_28 : i32
    %65 = arith.extui %64 : i1 to i32
    %c0_i32_29 = arith.constant 0 : i32
    %66 = arith.cmpi ne, %65, %c0_i32_29 : i32
    scf.if %66 {
      %c1_i32_42 = arith.constant 1 : i32
      %c1_i32_43 = arith.constant 1 : i32
      %c0_i32_44 = arith.constant 0 : i32
      %c0_i32_45 = arith.constant 0 : i32
      %91 = tpu.memref_slice %arg2[%63, %c0_i32_44, %c0_i32_45] : memref<6x8x128xf32, #tpu.memory_space<any>> -> memref<1x8x128xf32, #tpu.memory_space<any>>
      %92 = tpu.memref_squeeze %91 : memref<1x8x128xf32, #tpu.memory_space<any>> -> memref<8x128xf32, #tpu.memory_space<any>>
      %c0_i32_46 = arith.constant 0 : i32
      %c0_i32_47 = arith.constant 0 : i32
      %93 = tpu.memref_slice %arg3[%c1_i32_42, %c0_i32_46, %c0_i32_47] : memref<6x8x128xf32, #tpu.memory_space<vmem>> -> memref<1x8x128xf32, #tpu.memory_space<vmem>>
      %94 = tpu.memref_squeeze %93 : memref<1x8x128xf32, #tpu.memory_space<vmem>> -> memref<8x128xf32, #tpu.memory_space<vmem>>
      %95 = tpu.memref_slice %arg4[%c1_i32_43] : memref<6x!tpu.dma_semaphore, #tpu.memory_space<semaphore_mem>> -> memref<1x!tpu.dma_semaphore, #tpu.memory_space<semaphore_mem>>
      %96 = tpu.memref_squeeze %95 : memref<1x!tpu.dma_semaphore, #tpu.memory_space<semaphore_mem>> -> memref<!tpu.dma_semaphore, #tpu.memory_space<semaphore_mem>>
      tpu.wait_dma2 semaphore(%96 : memref<!tpu.dma_semaphore, #tpu.memory_space<semaphore_mem>>) src(%92 : memref<8x128xf32, #tpu.memory_space<any>>) dst(%94 : memref<8x128xf32, #tpu.memory_space<vmem>>)
    } else {
    }
    %c2_i32_30 = arith.constant 2 : i32
    %67 = arith.addi %0, %c2_i32_30 : i32
    %68 = arith.index_cast %67 : i32 to index
    %69 = memref.load %arg1[%68] : memref<12xi32, #tpu.memory_space<smem>>
    %c0_i32_31 = arith.constant 0 : i32
    %70 = arith.cmpi sge, %69, %c0_i32_31 : i32
    %71 = arith.extui %70 : i1 to i32
    %c0_i32_32 = arith.constant 0 : i32
    %72 = arith.cmpi ne, %71, %c0_i32_32 : i32
    scf.if %72 {
      %c2_i32_42 = arith.constant 2 : i32
      %c2_i32_43 = arith.constant 2 : i32
      %c0_i32_44 = arith.constant 0 : i32
      %c0_i32_45 = arith.constant 0 : i32
      %91 = tpu.memref_slice %arg2[%69, %c0_i32_44, %c0_i32_45] : memref<6x8x128xf32, #tpu.memory_space<any>> -> memref<1x8x128xf32, #tpu.memory_space<any>>
      %92 = tpu.memref_squeeze %91 : memref<1x8x128xf32, #tpu.memory_space<any>> -> memref<8x128xf32, #tpu.memory_space<any>>
      %c0_i32_46 = arith.constant 0 : i32
      %c0_i32_47 = arith.constant 0 : i32
      %93 = tpu.memref_slice %arg3[%c2_i32_42, %c0_i32_46, %c0_i32_47] : memref<6x8x128xf32, #tpu.memory_space<vmem>> -> memref<1x8x128xf32, #tpu.memory_space<vmem>>
      %94 = tpu.memref_squeeze %93 : memref<1x8x128xf32, #tpu.memory_space<vmem>> -> memref<8x128xf32, #tpu.memory_space<vmem>>
      %95 = tpu.memref_slice %arg4[%c2_i32_43] : memref<6x!tpu.dma_semaphore, #tpu.memory_space<semaphore_mem>> -> memref<1x!tpu.dma_semaphore, #tpu.memory_space<semaphore_mem>>
      %96 = tpu.memref_squeeze %95 : memref<1x!tpu.dma_semaphore, #tpu.memory_space<semaphore_mem>> -> memref<!tpu.dma_semaphore, #tpu.memory_space<semaphore_mem>>
      tpu.wait_dma2 semaphore(%96 : memref<!tpu.dma_semaphore, #tpu.memory_space<semaphore_mem>>) src(%92 : memref<8x128xf32, #tpu.memory_space<any>>) dst(%94 : memref<8x128xf32, #tpu.memory_space<vmem>>)
    } else {
    }
    %c3_i32_33 = arith.constant 3 : i32
    %73 = arith.addi %0, %c3_i32_33 : i32
    %74 = arith.index_cast %73 : i32 to index
    %75 = memref.load %arg1[%74] : memref<12xi32, #tpu.memory_space<smem>>
    %c0_i32_34 = arith.constant 0 : i32
    %76 = arith.cmpi sge, %75, %c0_i32_34 : i32
    %77 = arith.extui %76 : i1 to i32
    %c0_i32_35 = arith.constant 0 : i32
    %78 = arith.cmpi ne, %77, %c0_i32_35 : i32
    scf.if %78 {
      %c3_i32_42 = arith.constant 3 : i32
      %c3_i32_43 = arith.constant 3 : i32
      %c0_i32_44 = arith.constant 0 : i32
      %c0_i32_45 = arith.constant 0 : i32
      %91 = tpu.memref_slice %arg2[%75, %c0_i32_44, %c0_i32_45] : memref<6x8x128xf32, #tpu.memory_space<any>> -> memref<1x8x128xf32, #tpu.memory_space<any>>
      %92 = tpu.memref_squeeze %91 : memref<1x8x128xf32, #tpu.memory_space<any>> -> memref<8x128xf32, #tpu.memory_space<any>>
      %c0_i32_46 = arith.constant 0 : i32
      %c0_i32_47 = arith.constant 0 : i32
      %93 = tpu.memref_slice %arg3[%c3_i32_42, %c0_i32_46, %c0_i32_47] : memref<6x8x128xf32, #tpu.memory_space<vmem>> -> memref<1x8x128xf32, #tpu.memory_space<vmem>>
      %94 = tpu.memref_squeeze %93 : memref<1x8x128xf32, #tpu.memory_space<vmem>> -> memref<8x128xf32, #tpu.memory_space<vmem>>
      %95 = tpu.memref_slice %arg4[%c3_i32_43] : memref<6x!tpu.dma_semaphore, #tpu.memory_space<semaphore_mem>> -> memref<1x!tpu.dma_semaphore, #tpu.memory_space<semaphore_mem>>
      %96 = tpu.memref_squeeze %95 : memref<1x!tpu.dma_semaphore, #tpu.memory_space<semaphore_mem>> -> memref<!tpu.dma_semaphore, #tpu.memory_space<semaphore_mem>>
      tpu.wait_dma2 semaphore(%96 : memref<!tpu.dma_semaphore, #tpu.memory_space<semaphore_mem>>) src(%92 : memref<8x128xf32, #tpu.memory_space<any>>) dst(%94 : memref<8x128xf32, #tpu.memory_space<vmem>>)
    } else {
    }
    %c4_i32_36 = arith.constant 4 : i32
    %79 = arith.addi %0, %c4_i32_36 : i32
    %80 = arith.index_cast %79 : i32 to index
    %81 = memref.load %arg1[%80] : memref<12xi32, #tpu.memory_space<smem>>
    %c0_i32_37 = arith.constant 0 : i32
    %82 = arith.cmpi sge, %81, %c0_i32_37 : i32
    %83 = arith.extui %82 : i1 to i32
    %c0_i32_38 = arith.constant 0 : i32
    %84 = arith.cmpi ne, %83, %c0_i32_38 : i32
    scf.if %84 {
      %c4_i32_42 = arith.constant 4 : i32
      %c4_i32_43 = arith.constant 4 : i32
      %c0_i32_44 = arith.constant 0 : i32
      %c0_i32_45 = arith.constant 0 : i32
      %91 = tpu.memref_slice %arg2[%81, %c0_i32_44, %c0_i32_45] : memref<6x8x128xf32, #tpu.memory_space<any>> -> memref<1x8x128xf32, #tpu.memory_space<any>>
      %92 = tpu.memref_squeeze %91 : memref<1x8x128xf32, #tpu.memory_space<any>> -> memref<8x128xf32, #tpu.memory_space<any>>
      %c0_i32_46 = arith.constant 0 : i32
      %c0_i32_47 = arith.constant 0 : i32
      %93 = tpu.memref_slice %arg3[%c4_i32_42, %c0_i32_46, %c0_i32_47] : memref<6x8x128xf32, #tpu.memory_space<vmem>> -> memref<1x8x128xf32, #tpu.memory_space<vmem>>
      %94 = tpu.memref_squeeze %93 : memref<1x8x128xf32, #tpu.memory_space<vmem>> -> memref<8x128xf32, #tpu.memory_space<vmem>>
      %95 = tpu.memref_slice %arg4[%c4_i32_43] : memref<6x!tpu.dma_semaphore, #tpu.memory_space<semaphore_mem>> -> memref<1x!tpu.dma_semaphore, #tpu.memory_space<semaphore_mem>>
      %96 = tpu.memref_squeeze %95 : memref<1x!tpu.dma_semaphore, #tpu.memory_space<semaphore_mem>> -> memref<!tpu.dma_semaphore, #tpu.memory_space<semaphore_mem>>
      tpu.wait_dma2 semaphore(%96 : memref<!tpu.dma_semaphore, #tpu.memory_space<semaphore_mem>>) src(%92 : memref<8x128xf32, #tpu.memory_space<any>>) dst(%94 : memref<8x128xf32, #tpu.memory_space<vmem>>)
    } else {
    }
    %c5_i32_39 = arith.constant 5 : i32
    %85 = arith.addi %0, %c5_i32_39 : i32
    %86 = arith.index_cast %85 : i32 to index
    %87 = memref.load %arg1[%86] : memref<12xi32, #tpu.memory_space<smem>>
    %c0_i32_40 = arith.constant 0 : i32
    %88 = arith.cmpi sge, %87, %c0_i32_40 : i32
    %89 = arith.extui %88 : i1 to i32
    %c0_i32_41 = arith.constant 0 : i32
    %90 = arith.cmpi ne, %89, %c0_i32_41 : i32
    scf.if %90 {
      %c5_i32_42 = arith.constant 5 : i32
      %c5_i32_43 = arith.constant 5 : i32
      %c0_i32_44 = arith.constant 0 : i32
      %c0_i32_45 = arith.constant 0 : i32
      %91 = tpu.memref_slice %arg2[%87, %c0_i32_44, %c0_i32_45] : memref<6x8x128xf32, #tpu.memory_space<any>> -> memref<1x8x128xf32, #tpu.memory_space<any>>
      %92 = tpu.memref_squeeze %91 : memref<1x8x128xf32, #tpu.memory_space<any>> -> memref<8x128xf32, #tpu.memory_space<any>>
      %c0_i32_46 = arith.constant 0 : i32
      %c0_i32_47 = arith.constant 0 : i32
      %93 = tpu.memref_slice %arg3[%c5_i32_42, %c0_i32_46, %c0_i32_47] : memref<6x8x128xf32, #tpu.memory_space<vmem>> -> memref<1x8x128xf32, #tpu.memory_space<vmem>>
      %94 = tpu.memref_squeeze %93 : memref<1x8x128xf32, #tpu.memory_space<vmem>> -> memref<8x128xf32, #tpu.memory_space<vmem>>
      %95 = tpu.memref_slice %arg4[%c5_i32_43] : memref<6x!tpu.dma_semaphore, #tpu.memory_space<semaphore_mem>> -> memref<1x!tpu.dma_semaphore, #tpu.memory_space<semaphore_mem>>
      %96 = tpu.memref_squeeze %95 : memref<1x!tpu.dma_semaphore, #tpu.memory_space<semaphore_mem>> -> memref<!tpu.dma_semaphore, #tpu.memory_space<semaphore_mem>>
      tpu.wait_dma2 semaphore(%96 : memref<!tpu.dma_semaphore, #tpu.memory_space<semaphore_mem>>) src(%92 : memref<8x128xf32, #tpu.memory_space<any>>) dst(%94 : memref<8x128xf32, #tpu.memory_space<vmem>>)
    } else {
    }
    return
  }
  func.func @transform_1(%arg0: i32, %arg1: memref<12xi32, #tpu.memory_space<smem>>) -> (i32, i32, i32) {
    %c0_i32 = arith.constant 0 : i32
    %c0_i32_0 = arith.constant 0 : i32
    %c0_i32_1 = arith.constant 0 : i32
    return %arg0, %c0_i32, %c0_i32_0 : i32, i32, i32
  }
}

</mosaic_0001>

<llo_original>
// kernel: tpu_custom_call.1
$region0: #{tpu_custom_call.1}
  #allocation0 [shape = 'u32[]', space=smem, size = 0x4, offset = 0x4, fixed_abs, tag = 'smem constant byte address 0x4 - core index']
  #allocation1 [shape = 'u32[144,128]{1,0:T(1,128)}', space=vmem, size = 0x12000, scoped, tag = 'internal scratch']
  #allocation2 [shape = 's32[6]{0}', space=sflag, size = 0x18, scoped, tag = 'scratch operand']
  #allocation3 [shape = 's32[1]{0}', space=sflag, size = 0x4, scoped, tag = 'scoped memory for tpu_custom_call.1']
  #allocation4 [shape = 'u8[512]{0}', space=smem, size = 0x200, scoped, tag = 'prefetched SMEM operand 0']
  #allocation7 [shape = 's32[]', space=sflag, size = 0x4, offset = 0, fixed_abs, tag = 'sflag constant byte address 0x0 - dummy sync flag']
  #allocation8 [shape = 's32[]', space=sflag, size = 0x4, offset = 0, fixed_abs, tag = 'sflag constant byte address 0x0 - dummy sync flag']
  #allocation9 [shape = 'u32[]', space=smem, size = 0x4, offset = 0x44, fixed_abs, tag = 'smem constant byte address 0x44 - assertion arg 0']
  #allocation10 [shape = 'u32[]', space=smem, size = 0x4, offset = 0x48, fixed_abs, tag = 'smem constant byte address 0x48 - assertion arg 1']
  #allocation11 [shape = 's32[]', space=sflag, size = 0x4, offset = 0, fixed_abs, tag = 'sflag constant byte address 0x0 - dummy sync flag']
  #allocation12 [shape = 's32[]', space=sflag, size = 0x4, offset = 0, fixed_abs, tag = 'sflag constant byte address 0x0 - dummy sync flag']
  #allocation13 [shape = 's32[]', space=sflag, size = 0x4, offset = 0, fixed_abs, tag = 'sflag constant byte address 0x0 - dummy sync flag']
  #allocation14 [shape = 's32[]', space=sflag, size = 0x4, offset = 0, fixed_abs, tag = 'sflag constant byte address 0x0 - dummy sync flag']
  #allocation15 [shape = 's32[]', space=sflag, size = 0x4, offset = 0, fixed_abs, tag = 'sflag constant byte address 0x0 - dummy sync flag']
  #allocation16 [shape = 's32[]', space=sflag, size = 0x4, offset = 0, fixed_abs, tag = 'sflag constant byte address 0x0 - dummy sync flag']
  #allocation17 [shape = 's32[]', space=sflag, size = 0x4, offset = 0, fixed_abs, tag = 'sflag constant byte address 0x0 - dummy sync flag']
  #allocation18 [shape = 's32[]', space=sflag, size = 0x4, offset = 0, fixed_abs, tag = 'sflag constant byte address 0x0 - dummy sync flag']
  #allocation19 [shape = 's32[]', space=sflag, size = 0x4, offset = 0, fixed_abs, tag = 'sflag constant byte address 0x0 - dummy sync flag']
  #allocation20 [shape = 's32[]', space=sflag, size = 0x4, offset = 0, fixed_abs, tag = 'sflag constant byte address 0x0 - dummy sync flag']
  %s0 = inlined_call_operand.hbm [shape: s32[12], index: 0, kind: input, shape index: {}]
  %s1 = inlined_call_operand.hbm [shape: f32[6,8,128], index: 1, kind: input, shape index: {}]
  %s2 = inlined_call_operand.hbm [shape: f32[12,8,128], index: 2, kind: output, shape index: {}]
  %s3 = sld [smem:[#allocation0]]
  $region121: #{tpu_custom_call.1} parent=0
    _
  %s5 = ssub.s32 1, %s3
  %s6 = scalar_select 0, %s5, %s3
  %8 = dma.hbm_to_smem %s0, 16, [#allocation4], [#allocation3]
  %9 = dma.done [#allocation3], 16
  %10 = sfence
  $region1: #{tpu_custom_call.1} parent=0
    #allocation5 [shape = 'u8[49152]{0}', space=vmem, size = 0xc000, scoped, tag = 'output window, operand 0']
    #allocation6 [shape = 's32[2]{0}', space=sflag, size = 0x8, scoped, tag = 'scoped memory for tpu_custom_call.1']
    %11 = vsyncpa [#allocation6], 0
    %s12 = scalar_lea.sflag [#allocation6], 1
    %13 = vsyncpa %s12, 0
    loop: start=0, step=1, limit=3
    $region2: #{tpu_custom_call.1} parent=1 // loop_pre_header
      _
    $region3: #{tpu_custom_call.1} parent=1 // loop_header
      %s15 = sphi 0, %s19
      %p16 = scmp.ge.s32.totalorder %s15, 3
      %s24 = sphi 0, %s26
      %s27 = sphi 0, %s24
      %s37 = sphi 0, %s27
    $region4: #{tpu_custom_call.1} parent=1 // loop_header_branch
      %18 = sbr.rel (%p16) target = $region8
    $region5: #{tpu_custom_call.1} parent=1 // loop_body
      %s20 = ssub.s32 %s15, 1
      %s21 = sadd.s32 %s15, 1
      %s22 = ssub.s32 %s15, %s21
      %p23 = scmp.eq.s32.totalorder %s22, 0
      %s25 = sadd.s32 %s24, 1
      %s26 = scalar_select %p23, %s24, %s25
      %p28 = pneg %p23
      %p29 = scmp.eq.s32.totalorder %s15, 1
      %p30 = por %p28, %p29
      %p31 = scmp.ne.s32.totalorder %s24, %s27
      %p32 = scmp.eq.s32.totalorder %s15, 0
      %p33 = por %p31, %p32
      %p34 = scmp.ne.s32.totalorder %s24, %s27
      %p35 = scmp.eq.s32.totalorder %s20, 1
      %p36 = por %p34, %p35
      %p38 = scmp.ne.s32.totalorder %s27, %s37
      %p39 = scmp.eq.s32.totalorder %s20, 0
      %p40 = por %p38, %p39
      %p41 = scmp.lt.s32.totalorder %s15, 2
      // Predicated region
      $region9: #{tpu_custom_call.1} parent=5 // pred_check
        %p42 = pneg %p41
      $region10: #{tpu_custom_call.1} parent=5 // pred_check_branch
        %44 = sbr.rel (%p42) target = $region12
      $region11: #{tpu_custom_call.1} parent=5 // pred_region
        %p45 = pneg %p33
        %p46 = pneg %p30
        %s47 = sand.u32 %s24, 1
        %s48 = scalar_lea.sflag [#allocation6], %s47
        %s49 = sand.u32 %s24, 1
        %s50 = smul.addr %s49, 48
        %s51 = scalar_lea.vmem [#allocation5], %s50
        %s52 = smul.u32 6, %s15
        %s53 = smul.u32 %s15, 6
        %s54 = sld [smem:[#allocation4 + %s53]]
        %p55 = scmp.ge.s32.totalorder %s54, 0
        // Predicated region
        $region13: #{tpu_custom_call.1} parent=11 // pred_check
          %p56 = pneg %p55
        $region14: #{tpu_custom_call.1} parent=11 // pred_check_branch
          %58 = sbr.rel (%p56) target = $region16
        $region15: #{tpu_custom_call.1} parent=11 // pred_region
          %s59 = smul.u32 %s54, 8
          %s60 = smul.addr %s59, 16
          %s61 = scalar_lea.hbm %s1, %s60
          // Predicated region
          $region17: #{tpu_custom_call.1} parent=15 // pred_check
            _
          $region18: #{tpu_custom_call.1} parent=15 // pred_check_branch
            %63 = sbr.rel target = $region20
          $region19: #{tpu_custom_call.1} parent=15 // pred_region
            %64 = sst [smem:[#allocation9]] [#allocation8]
            %65 = sst [smem:[#allocation10]] [#allocation7]
          $region20: #{tpu_custom_call.1} parent=15 // pred_fallthru
            _
          %67 = shalt.err (0)
          %s69 = sshll.u32 %s51, 4
          %s70 = int_to_ptr.vmem [resolvable:$true] %s69
          %72 = dma.hbm_to_vmem [thread:$0]  %s61, 128, %s70, [#allocation2]
        $region16: #{tpu_custom_call.1} parent=11 // pred_fallthru
          _
        %p73 = scmp.lt.s32.totalorder %s54, 0
        // Predicated region
        $region21: #{tpu_custom_call.1} parent=11 // pred_check
          %p74 = pneg %p73
        $region22: #{tpu_custom_call.1} parent=11 // pred_check_branch
          %76 = sbr.rel (%p74) target = $region24
        $region23: #{tpu_custom_call.1} parent=11 // pred_region
          %77 = vst [vmem:[%s51] sm:$0xff] 0.0
        $region24: #{tpu_custom_call.1} parent=11 // pred_fallthru
          _
        %s78 = sadd.s32 %s53, 1
        %s79 = sld [smem:[#allocation4 + %s78]]
        %p80 = scmp.ge.s32.totalorder %s79, 0
        // Predicated region
        $region25: #{tpu_custom_call.1} parent=11 // pred_check
          %p81 = pneg %p80
        $region26: #{tpu_custom_call.1} parent=11 // pred_check_branch
          %83 = sbr.rel (%p81) target = $region28
        $region27: #{tpu_custom_call.1} parent=11 // pred_region
          %s84 = smul.u32 %s79, 8
          %s85 = smul.addr %s84, 16
          %s86 = scalar_lea.hbm %s1, %s85
          %s87 = scalar_lea.vmem %s51, 8 [#allocation5]
          %s88 = scalar_lea.sflag [#allocation2], 1
          // Predicated region
          $region29: #{tpu_custom_call.1} parent=27 // pred_check
            _
          $region30: #{tpu_custom_call.1} parent=27 // pred_check_branch
            %90 = sbr.rel target = $region32
          $region31: #{tpu_custom_call.1} parent=27 // pred_region
            %91 = sst [smem:[#allocation9]] [#allocation12]
            %92 = sst [smem:[#allocation10]] [#allocation11]
          $region32: #{tpu_custom_call.1} parent=27 // pred_fallthru
            _
          %94 = shalt.err (0)
          %s96 = sshll.u32 %s87, 4
          %s97 = int_to_ptr.vmem [resolvable:$true] %s96
          %99 = dma.hbm_to_vmem [thread:$0]  %s86, 128, %s97, %s88
        $region28: #{tpu_custom_call.1} parent=11 // pred_fallthru
          _
        %p100 = scmp.lt.s32.totalorder %s79, 0
        // Predicated region
        $region33: #{tpu_custom_call.1} parent=11 // pred_check
          %p101 = pneg %p100
        $region34: #{tpu_custom_call.1} parent=11 // pred_check_branch
          %103 = sbr.rel (%p101) target = $region36
        $region35: #{tpu_custom_call.1} parent=11 // pred_region
          %s104 = scalar_lea.vmem %s51, 8 [#allocation5]
          %105 = vst [vmem:[%s104] sm:$0xff] 0.0
        $region36: #{tpu_custom_call.1} parent=11 // pred_fallthru
          _
        %s106 = sadd.s32 %s53, 2
        %s107 = sld [smem:[#allocation4 + %s106]]
        %p108 = scmp.ge.s32.totalorder %s107, 0
        // Predicated region
        $region37: #{tpu_custom_call.1} parent=11 // pred_check
          %p109 = pneg %p108
        $region38: #{tpu_custom_call.1} parent=11 // pred_check_branch
          %111 = sbr.rel (%p109) target = $region40
        $region39: #{tpu_custom_call.1} parent=11 // pred_region
          %s112 = smul.u32 %s107, 8
          %s113 = smul.addr %s112, 16
          %s114 = scalar_lea.hbm %s1, %s113
          %s115 = scalar_lea.vmem %s51, 16 [#allocation5]
          %s116 = scalar_lea.sflag [#allocation2], 2
          // Predicated region
          $region41: #{tpu_custom_call.1} parent=39 // pred_check
            _
          $region42: #{tpu_custom_call.1} parent=39 // pred_check_branch
            %118 = sbr.rel target = $region44
          $region43: #{tpu_custom_call.1} parent=39 // pred_region
            %119 = sst [smem:[#allocation9]] [#allocation14]
            %120 = sst [smem:[#allocation10]] [#allocation13]
          $region44: #{tpu_custom_call.1} parent=39 // pred_fallthru
            _
          %122 = shalt.err (0)
          %s124 = sshll.u32 %s115, 4
          %s125 = int_to_ptr.vmem [resolvable:$true] %s124
          %127 = dma.hbm_to_vmem [thread:$0]  %s114, 128, %s125, %s116
        $region40: #{tpu_custom_call.1} parent=11 // pred_fallthru
          _
        %p128 = scmp.lt.s32.totalorder %s107, 0
        // Predicated region
        $region45: #{tpu_custom_call.1} parent=11 // pred_check
          %p129 = pneg %p128
        $region46: #{tpu_custom_call.1} parent=11 // pred_check_branch
          %131 = sbr.rel (%p129) target = $region48
        $region47: #{tpu_custom_call.1} parent=11 // pred_region
          %s132 = scalar_lea.vmem %s51, 16 [#allocation5]
          %133 = vst [vmem:[%s132] sm:$0xff] 0.0
        $region48: #{tpu_custom_call.1} parent=11 // pred_fallthru
          _
        %s134 = sadd.s32 %s53, 3
        %s135 = sld [smem:[#allocation4 + %s134]]
        %p136 = scmp.ge.s32.totalorder %s135, 0
        // Predicated region
        $region49: #{tpu_custom_call.1} parent=11 // pred_check
          %p137 = pneg %p136
        $region50: #{tpu_custom_call.1} parent=11 // pred_check_branch
          %139 = sbr.rel (%p137) target = $region52
        $region51: #{tpu_custom_call.1} parent=11 // pred_region
          %s140 = smul.u32 %s135, 8
          %s141 = smul.addr %s140, 16
          %s142 = scalar_lea.hbm %s1, %s141
          %s143 = scalar_lea.vmem %s51, 24 [#allocation5]
          %s144 = scalar_lea.sflag [#allocation2], 3
          // Predicated region
          $region53: #{tpu_custom_call.1} parent=51 // pred_check
            _
          $region54: #{tpu_custom_call.1} parent=51 // pred_check_branch
            %146 = sbr.rel target = $region56
          $region55: #{tpu_custom_call.1} parent=51 // pred_region
            %147 = sst [smem:[#allocation9]] [#allocation16]
            %148 = sst [smem:[#allocation10]] [#allocation15]
          $region56: #{tpu_custom_call.1} parent=51 // pred_fallthru
            _
          %150 = shalt.err (0)
          %s152 = sshll.u32 %s143, 4
          %s153 = int_to_ptr.vmem [resolvable:$true] %s152
          %155 = dma.hbm_to_vmem [thread:$0]  %s142, 128, %s153, %s144
        $region52: #{tpu_custom_call.1} parent=11 // pred_fallthru
          _
        %p156 = scmp.lt.s32.totalorder %s135, 0
        // Predicated region
        $region57: #{tpu_custom_call.1} parent=11 // pred_check
          %p157 = pneg %p156
        $region58: #{tpu_custom_call.1} parent=11 // pred_check_branch
          %159 = sbr.rel (%p157) target = $region60
        $region59: #{tpu_custom_call.1} parent=11 // pred_region
          %s160 = scalar_lea.vmem %s51, 24 [#allocation5]
          %161 = vst [vmem:[%s160] sm:$0xff] 0.0
        $region60: #{tpu_custom_call.1} parent=11 // pred_fallthru
          _
        %s162 = sadd.s32 %s53, 4
        %s163 = sld [smem:[#allocation4 + %s162]]
        %p164 = scmp.ge.s32.totalorder %s163, 0
        // Predicated region
        $region61: #{tpu_custom_call.1} parent=11 // pred_check
          %p165 = pneg %p164
        $region62: #{tpu_custom_call.1} parent=11 // pred_check_branch
          %167 = sbr.rel (%p165) target = $region64
        $region63: #{tpu_custom_call.1} parent=11 // pred_region
          %s168 = smul.u32 %s163, 8
          %s169 = smul.addr %s168, 16
          %s170 = scalar_lea.hbm %s1, %s169
          %s171 = scalar_lea.vmem %s51, 32 [#allocation5]
          %s172 = scalar_lea.sflag [#allocation2], 4
          // Predicated region
          $region65: #{tpu_custom_call.1} parent=63 // pred_check
            _
          $region66: #{tpu_custom_call.1} parent=63 // pred_check_branch
            %174 = sbr.rel target = $region68
          $region67: #{tpu_custom_call.1} parent=63 // pred_region
            %175 = sst [smem:[#allocation9]] [#allocation18]
            %176 = sst [smem:[#allocation10]] [#allocation17]
          $region68: #{tpu_custom_call.1} parent=63 // pred_fallthru
            _
          %178 = shalt.err (0)
          %s180 = sshll.u32 %s171, 4
          %s181 = int_to_ptr.vmem [resolvable:$true] %s180
          %183 = dma.hbm_to_vmem [thread:$0]  %s170, 128, %s181, %s172
        $region64: #{tpu_custom_call.1} parent=11 // pred_fallthru
          _
        %p184 = scmp.lt.s32.totalorder %s163, 0
        // Predicated region
        $region69: #{tpu_custom_call.1} parent=11 // pred_check
          %p185 = pneg %p184
        $region70: #{tpu_custom_call.1} parent=11 // pred_check_branch
          %187 = sbr.rel (%p185) target = $region72
        $region71: #{tpu_custom_call.1} parent=11 // pred_region
          %s188 = scalar_lea.vmem %s51, 32 [#allocation5]
          %189 = vst [vmem:[%s188] sm:$0xff] 0.0
        $region72: #{tpu_custom_call.1} parent=11 // pred_fallthru
          _
        %s190 = sadd.s32 %s53, 5
        %s191 = sld [smem:[#allocation4 + %s190]]
        %p192 = scmp.ge.s32.totalorder %s191, 0
        // Predicated region
        $region73: #{tpu_custom_call.1} parent=11 // pred_check
          %p193 = pneg %p192
        $region74: #{tpu_custom_call.1} parent=11 // pred_check_branch
          %195 = sbr.rel (%p193) target = $region76
        $region75: #{tpu_custom_call.1} parent=11 // pred_region
          %s196 = smul.u32 %s191, 8
          %s197 = smul.addr %s196, 16
          %s198 = scalar_lea.hbm %s1, %s197
          %s199 = scalar_lea.vmem %s51, 40 [#allocation5]
          %s200 = scalar_lea.sflag [#allocation2], 5
          // Predicated region
          $region77: #{tpu_custom_call.1} parent=75 // pred_check
            _
          $region78: #{tpu_custom_call.1} parent=75 // pred_check_branch
            %202 = sbr.rel target = $region80
          $region79: #{tpu_custom_call.1} parent=75 // pred_region
            %203 = sst [smem:[#allocation9]] [#allocation20]
            %204 = sst [smem:[#allocation10]] [#allocation19]
          $region80: #{tpu_custom_call.1} parent=75 // pred_fallthru
            _
          %206 = shalt.err (0)
          %s208 = sshll.u32 %s199, 4
          %s209 = int_to_ptr.vmem [resolvable:$true] %s208
          %211 = dma.hbm_to_vmem [thread:$0]  %s198, 128, %s209, %s200
        $region76: #{tpu_custom_call.1} parent=11 // pred_fallthru
          _
        %p212 = scmp.lt.s32.totalorder %s191, 0
        // Predicated region
        $region81: #{tpu_custom_call.1} parent=11 // pred_check
          %p213 = pneg %p212
        $region82: #{tpu_custom_call.1} parent=11 // pred_check_branch
          %215 = sbr.rel (%p213) target = $region84
        $region83: #{tpu_custom_call.1} parent=11 // pred_region
          %s216 = scalar_lea.vmem %s51, 40 [#allocation5]
          %217 = vst [vmem:[%s216] sm:$0xff] 0.0
        $region84: #{tpu_custom_call.1} parent=11 // pred_fallthru
          _
        %s218 = sld [smem:[#allocation4 + %s53]]
        %p219 = scmp.ge.s32.totalorder %s218, 0
        // Predicated region
        $region85: #{tpu_custom_call.1} parent=11 // pred_check
          %p220 = pneg %p219
        $region86: #{tpu_custom_call.1} parent=11 // pred_check_branch
          %222 = sbr.rel (%p220) target = $region88
        $region87: #{tpu_custom_call.1} parent=11 // pred_region
          %s223 = smul.u32 8, 1
          %s224 = sshll.u32 %s223, 4
          %225 = dma.done [#allocation2], %s224
        $region88: #{tpu_custom_call.1} parent=11 // pred_fallthru
          _
        %s226 = sld [smem:[#allocation4 + %s78]]
        %p227 = scmp.ge.s32.totalorder %s226, 0
        // Predicated region
        $region89: #{tpu_custom_call.1} parent=11 // pred_check
          %p228 = pneg %p227
        $region90: #{tpu_custom_call.1} parent=11 // pred_check_branch
          %230 = sbr.rel (%p228) target = $region92
        $region91: #{tpu_custom_call.1} parent=11 // pred_region
          %s231 = scalar_lea.sflag [#allocation2], 1
          %s232 = smul.u32 8, 1
          %s233 = sshll.u32 %s232, 4
          %234 = dma.done %s231, %s233
        $region92: #{tpu_custom_call.1} parent=11 // pred_fallthru
          _
        %s235 = sld [smem:[#allocation4 + %s106]]
        %p236 = scmp.ge.s32.totalorder %s235, 0
        // Predicated region
        $region93: #{tpu_custom_call.1} parent=11 // pred_check
          %p237 = pneg %p236
        $region94: #{tpu_custom_call.1} parent=11 // pred_check_branch
          %239 = sbr.rel (%p237) target = $region96
        $region95: #{tpu_custom_call.1} parent=11 // pred_region
          %s240 = scalar_lea.sflag [#allocation2], 2
          %s241 = smul.u32 8, 1
          %s242 = sshll.u32 %s241, 4
          %243 = dma.done %s240, %s242
        $region96: #{tpu_custom_call.1} parent=11 // pred_fallthru
          _
        %s244 = sld [smem:[#allocation4 + %s134]]
        %p245 = scmp.ge.s32.totalorder %s244, 0
        // Predicated region
        $region97: #{tpu_custom_call.1} parent=11 // pred_check
          %p246 = pneg %p245
        $region98: #{tpu_custom_call.1} parent=11 // pred_check_branch
          %248 = sbr.rel (%p246) target = $region100
        $region99: #{tpu_custom_call.1} parent=11 // pred_region
          %s249 = scalar_lea.sflag [#allocation2], 3
          %s250 = smul.u32 8, 1
          %s251 = sshll.u32 %s250, 4
          %252 = dma.done %s249, %s251
        $region100: #{tpu_custom_call.1} parent=11 // pred_fallthru
          _
        %s253 = sld [smem:[#allocation4 + %s162]]
        %p254 = scmp.ge.s32.totalorder %s253, 0
        // Predicated region
        $region101: #{tpu_custom_call.1} parent=11 // pred_check
          %p255 = pneg %p254
        $region102: #{tpu_custom_call.1} parent=11 // pred_check_branch
          %257 = sbr.rel (%p255) target = $region104
        $region103: #{tpu_custom_call.1} parent=11 // pred_region
          %s258 = scalar_lea.sflag [#allocation2], 4
          %s259 = smul.u32 8, 1
          %s260 = sshll.u32 %s259, 4
          %261 = dma.done %s258, %s260
        $region104: #{tpu_custom_call.1} parent=11 // pred_fallthru
          _
        %s262 = sld [smem:[#allocation4 + %s190]]
        %p263 = scmp.ge.s32.totalorder %s262, 0
        // Predicated region
        $region105: #{tpu_custom_call.1} parent=11 // pred_check
          %p264 = pneg %p263
        $region106: #{tpu_custom_call.1} parent=11 // pred_check_branch
          %266 = sbr.rel (%p264) target = $region108
        $region107: #{tpu_custom_call.1} parent=11 // pred_region
          %s267 = scalar_lea.sflag [#allocation2], 5
          %s268 = smul.u32 8, 1
          %s269 = sshll.u32 %s268, 4
          %270 = dma.done %s267, %s269
        $region108: #{tpu_custom_call.1} parent=11 // pred_fallthru
          _
        %s271 = sand.u32 %s24, 1
        %s272 = scalar_lea.sflag [#allocation6], %s271
        %s273 = sand.u32 %s24, 1
        %s274 = smul.addr %s273, 48
        %s275 = scalar_lea.vmem [#allocation5], %s274
        // Predicated region
        $region109: #{tpu_custom_call.1} parent=11 // pred_check
          %p276 = pneg %p30
        $region110: #{tpu_custom_call.1} parent=11 // pred_check_branch
          %278 = sbr.rel (%p276) target = $region112
        $region111: #{tpu_custom_call.1} parent=11 // pred_region
          %s279 = smul.u32 6, %s15
          %s281 = ssub.s32 768, 768
          %282 = vsyncadd %s272, %s281
          %s283 = smul.addr %s279, 128
          %s284 = scalar_lea.hbm %s2, %s283
          %s285 = sshll.u32 %s275, 4
          %s286 = int_to_ptr.vmem [resolvable:$true] %s285
          %291 = dma.vmem_to_hbm [thread:$0]  %s286, 768, %s284, %s272, 128, 128, 8
        $region112: #{tpu_custom_call.1} parent=11 // pred_fallthru
          _
      $region12: #{tpu_custom_call.1} parent=5 // pred_fallthru
        _
      %p292 = scmp.le.s32.totalorder 1, %s15
      // Predicated region
      $region113: #{tpu_custom_call.1} parent=5 // pred_check
        %p293 = pneg %p292
      $region114: #{tpu_custom_call.1} parent=5 // pred_check_branch
        %295 = sbr.rel (%p293) target = $region116
      $region115: #{tpu_custom_call.1} parent=5 // pred_region
        %s296 = ssub.s32 %s15, 1
        // Predicated region
        $region117: #{tpu_custom_call.1} parent=115 // pred_check
          %p297 = pneg %p36
        $region118: #{tpu_custom_call.1} parent=115 // pred_check_branch
          %299 = sbr.rel (%p297) target = $region120
        $region119: #{tpu_custom_call.1} parent=115 // pred_region
          %s300 = sand.u32 %s27, 1
          %s301 = scalar_lea.sflag [#allocation6], %s300
          %s302 = sand.u32 %s27, 1
          %s303 = smul.addr %s302, 48
          %s304 = scalar_lea.vmem [#allocation5], %s303
          %305 = dma.done %s301, 768
        $region120: #{tpu_custom_call.1} parent=115 // pred_fallthru
          _
      $region116: #{tpu_custom_call.1} parent=5 // pred_fallthru
        _
    $region6: #{tpu_custom_call.1} parent=1 // loop_footer
      %s19 = sadd.s32 1, %s15
    $region7: #{tpu_custom_call.1} parent=1 // loop_footer_branch
      %14 = sbr.rel target = $region3
    $region8: #{tpu_custom_call.1} parent=1 // loop_exit
      _
    %306 = vsyncpa [#allocation6], 1
    %s307 = scalar_lea.sflag [#allocation6], 1
    %308 = vsyncpa %s307, 1
  %309 = vsyncmov [#allocation2]
  %s310 = vpop.sfrf %309
  %p311 = scmp.eq.s32.totalorder %s310, 0
  %p312 = pneg %p311
  %314 = shalt.err (%p312)
  %s315 = scalar_lea.sflag [#allocation2], 1
  %316 = vsyncmov %s315
  %s317 = vpop.sfrf %316
  %p318 = scmp.eq.s32.totalorder %s317, 0
  %p319 = pneg %p318
  %321 = shalt.err (%p319)
  %s322 = scalar_lea.sflag [#allocation2], 2
  %323 = vsyncmov %s322
  %s324 = vpop.sfrf %323
  %p325 = scmp.eq.s32.totalorder %s324, 0
  %p326 = pneg %p325
  %328 = shalt.err (%p326)
  %s329 = scalar_lea.sflag [#allocation2], 3
  %330 = vsyncmov %s329
  %s331 = vpop.sfrf %330
  %p332 = scmp.eq.s32.totalorder %s331, 0
  %p333 = pneg %p332
  %335 = shalt.err (%p333)
  %s336 = scalar_lea.sflag [#allocation2], 4
  %337 = vsyncmov %s336
  %s338 = vpop.sfrf %337
  %p339 = scmp.eq.s32.totalorder %s338, 0
  %p340 = pneg %p339
  %342 = shalt.err (%p340)
  %s343 = scalar_lea.sflag [#allocation2], 5
  %344 = vsyncmov %s343
  %s345 = vpop.sfrf %344
  %p346 = scmp.eq.s32.totalorder %s345, 0
  %p347 = pneg %p346
  %349 = shalt.err (%p347)

</llo_original>
